<compile_context>
chip_gen: v5e
topology: v5e:2x2
jax: 0.10.0
libtpu: 0.0.40
codegen_flags: <defaults>
</compile_context>

<pallas_src>
import functools

import jax
import jax.numpy as jnp
from jax.experimental import pallas as pl
from jax.experimental.pallas import tpu as pltpu


def _cat_slice_cat_kernel(x1_ref, x2_ref, x3_ref, o_ref, *, C, n2):
    base = 3 * C
    off = 0
    rem = n2
    for k, src in enumerate((x1_ref, x2_ref, x3_ref)):
        v = src[...]  # single VMEM read of this input tile
        # v1 region: channels [k*C, (k+1)*C)
        o_ref[:, k * C:(k + 1) * C, :] = v
        # v3 tail: first n2 channels of v1, spilling x1 -> x2 -> x3 if n2 > C.
        if rem > 0:
            take = min(rem, C)  # static Python int -> static slice
            o_ref[:, base + off:base + off + take, :] = v[:, 0:take, :]
            off += take
            rem -= take


def _pick_lane_tile(HW, bytes_per_lane, budget_bytes):
    """Lane tile policy for a mem-bound copy.

    Tiles are 128-multiples capped at 1024 lanes.  Preference order:
      1. fits the double-buffered VMEM budget,
      2. yields >= 4 grid steps (pipeline depth),
      3. yields an even step count (v7x 2-TC sharding),
      4. largest tile.
    Ragged last blocks are fine (block last dim stays a 128-multiple)."""
    if HW <= 128:
        return HW  # single full-extent block; (8,128) rule satisfied trivially
    fitting = [c for c in (1024, 512, 256, 128)
               if c < HW and 2 * c * bytes_per_lane <= budget_bytes]
    if not fitting:
        # Even a 128-lane tile exceeds the budget; caller splits the batch axis.
        return 128
    deep = [c for c in fitting if pl.cdiv(HW, c) >= 4]
    pool = deep if deep else fitting
    even = [c for c in pool if pl.cdiv(HW, c) % 2 == 0]
    pool = even if even else pool
    return max(pool)


def model_forward(x1, x2, x3, *, n1, n2):
    """Pallas equivalent of Model(n1, n2).forward(x1, x2, x3). n1 is unused."""
    del n1  # unused by the reference module
    N, C, H, W = x1.shape
    assert x2.shape == x1.shape and x3.shape == x1.shape

    # Exact Python/PyTorch slice semantics for v1[:, 0:n2] (clamps, handles
    # negative stops) -- number of channels actually taken:
    n2_eff = len(range(3 * C)[slice(0, n2)])

    HW = H * W
    out_c = 3 * C + n2_eff
    itemsize = jnp.dtype(x1.dtype).itemsize
    per_batch_lane_bytes = (3 * C + out_c) * itemsize  # 3 inputs + output

    BUDGET = 20 << 20      # target double-buffered VMEM footprint
    VMEM_LIMIT = 32 << 20  # valid scoped limit on v5e/v6e/v7x

    # Split the batch axis only if even a 128-lane tile would blow the budget
    # (keeps tiles lane-dense instead of dropping below 128 lanes).
    nb = N
    min_tile = min(HW, 128)
    if 2 * min_tile * N * per_batch_lane_bytes > BUDGET:
        nb = max(1, BUDGET // (2 * min_tile * per_batch_lane_bytes))
        nb = min(nb, N)

    tile_hw = _pick_lane_tile(HW, nb * per_batch_lane_bytes, BUDGET)
    grid = (pl.cdiv(N, nb), pl.cdiv(HW, tile_hw))

    x1f = x1.reshape(N, C, HW)
    x2f = x2.reshape(N, C, HW)
    x3f = x3.reshape(N, C, HW)

    kernel = functools.partial(_cat_slice_cat_kernel, C=C, n2=n2_eff)

    in_spec = pl.BlockSpec((nb, C, tile_hw), lambda b, i: (b, 0, i))
    out_spec = pl.BlockSpec((nb, out_c, tile_hw), lambda b, i: (b, 0, i))

    out = pl.pallas_call(
        kernel,
        out_shape=jax.ShapeDtypeStruct((N, out_c, HW), x1.dtype),
        grid=grid,
        in_specs=[in_spec, in_spec, in_spec],
        out_specs=out_spec,
        # Every grid step writes a disjoint output tile -> safe to shard both
        # axes across TensorCores on v7x; no effect on single-TC v5e/v6e.
        compiler_params=pltpu.CompilerParams(
            dimension_semantics=("parallel", "parallel"),
            vmem_limit_bytes=VMEM_LIMIT),
    )(x1f, x2f, x3f)

    return out.reshape(N, out_c, H, W)


def _reference(x1, x2, x3, n2):
    v1 = jnp.concatenate([x1, x2, x3], axis=1)
    n2_eff = len(range(v1.shape[1])[slice(0, n2)])
    v3 = v1[:, 0:n2_eff]
    return jnp.concatenate([v1, v3], axis=1)


if __name__ == "__main__":
    # Small shapes consistent with the module (original was 1x32x64x64 each).
    # C and n2 are multiples of 8 so every channel-offset store is
    # sublane-aligned (unmasked vst); n2 > C exercises the tail spill path.
    N, C, H, W = 2, 8, 16, 16
    n1, n2 = 3, 16  # n1 unused by forward; n2 slices into the concat

    key = jax.random.PRNGKey(0)
    k1, k2, k3 = jax.random.split(key, 3)
    x1 = jax.random.normal(k1, (N, C, H, W), dtype=jnp.float32)
    x2 = jax.random.normal(k2, (N, C, H, W), dtype=jnp.float32)
    x3 = jax.random.normal(k3, (N, C, H, W), dtype=jnp.float32)

    out = model_forward(x1, x2, x3, n1=n1, n2=n2)
    out = jax.block_until_ready(out)

    ref = _reference(x1, x2, x3, n2)
    assert out.shape == (N, 3 * C + n2, H, W), out.shape
    assert jnp.array_equal(out, ref), "Pallas output mismatch vs reference"

    print("KERNEL_OK")
</pallas_src>

<mosaic_0001>
module attributes {stable_mosaic.version = 11 : i64} {
  func.func @_cat_slice_cat_kernel(%arg0: i32, %arg1: i32, %arg2: memref<2x8x128xf32, #tpu.memory_space<vmem>>, %arg3: memref<2x8x128xf32, #tpu.memory_space<vmem>>, %arg4: memref<2x8x128xf32, #tpu.memory_space<vmem>>, %arg5: memref<2x40x128xf32, #tpu.memory_space<vmem>>) attributes {dimension_semantics = [#tpu.dimension_semantics<parallel>, #tpu.dimension_semantics<parallel>], iteration_bounds = array<i64: 1, 2>, scalar_prefetch = 0 : i64, scratch_operands = 0 : i64, tpu.core_type = #tpu.core_type<tc>, window_params = [{transform_indices = @transform_0, window_bounds = array<i64: 2, 8, 128>}, {transform_indices = @transform_1, window_bounds = array<i64: 2, 8, 128>}, {transform_indices = @transform_2, window_bounds = array<i64: 2, 8, 128>}, {transform_indices = @transform_3, window_bounds = array<i64: 2, 40, 128>}]} {
    %c0 = arith.constant 0 : index
    %c0_0 = arith.constant 0 : index
    %c0_1 = arith.constant 0 : index
    %0 = vector.load %arg2[%c0, %c0_0, %c0_1] : memref<2x8x128xf32, #tpu.memory_space<vmem>>, vector<2x8x128xf32>
    %c0_2 = arith.constant 0 : index
    %c0_3 = arith.constant 0 : index
    %c0_4 = arith.constant 0 : index
    %1 = vector.load %arg5[%c0_2, %c0_3, %c0_4] : memref<2x40x128xf32, #tpu.memory_space<vmem>>, vector<2x8x128xf32>
    tpu.vector_store %arg5[%c0_2, %c0_3, %c0_4], %0 {strides = array<i32>} : memref<2x40x128xf32, #tpu.memory_space<vmem>>, vector<2x8x128xf32>,
    %c0_5 = arith.constant 0 : index
    %c24 = arith.constant 24 : index
    %c0_6 = arith.constant 0 : index
    %2 = vector.load %arg5[%c0_5, %c24, %c0_6] : memref<2x40x128xf32, #tpu.memory_space<vmem>>, vector<2x8x128xf32>
    tpu.vector_store %arg5[%c0_5, %c24, %c0_6], %0 {strides = array<i32>} : memref<2x40x128xf32, #tpu.memory_space<vmem>>, vector<2x8x128xf32>,
    %c0_7 = arith.constant 0 : index
    %c0_8 = arith.constant 0 : index
    %c0_9 = arith.constant 0 : index
    %3 = vector.load %arg3[%c0_7, %c0_8, %c0_9] : memref<2x8x128xf32, #tpu.memory_space<vmem>>, vector<2x8x128xf32>
    %c0_10 = arith.constant 0 : index
    %c8 = arith.constant 8 : index
    %c0_11 = arith.constant 0 : index
    %4 = vector.load %arg5[%c0_10, %c8, %c0_11] : memref<2x40x128xf32, #tpu.memory_space<vmem>>, vector<2x8x128xf32>
    tpu.vector_store %arg5[%c0_10, %c8, %c0_11], %3 {strides = array<i32>} : memref<2x40x128xf32, #tpu.memory_space<vmem>>, vector<2x8x128xf32>,
    %c0_12 = arith.constant 0 : index
    %c32 = arith.constant 32 : index
    %c0_13 = arith.constant 0 : index
    %5 = vector.load %arg5[%c0_12, %c32, %c0_13] : memref<2x40x128xf32, #tpu.memory_space<vmem>>, vector<2x8x128xf32>
    tpu.vector_store %arg5[%c0_12, %c32, %c0_13], %3 {strides = array<i32>} : memref<2x40x128xf32, #tpu.memory_space<vmem>>, vector<2x8x128xf32>,
    %c0_14 = arith.constant 0 : index
    %c0_15 = arith.constant 0 : index
    %c0_16 = arith.constant 0 : index
    %6 = vector.load %arg4[%c0_14, %c0_15, %c0_16] : memref<2x8x128xf32, #tpu.memory_space<vmem>>, vector<2x8x128xf32>
    %c0_17 = arith.constant 0 : index
    %c16 = arith.constant 16 : index
    %c0_18 = arith.constant 0 : index
    %7 = vector.load %arg5[%c0_17, %c16, %c0_18] : memref<2x40x128xf32, #tpu.memory_space<vmem>>, vector<2x8x128xf32>
    tpu.vector_store %arg5[%c0_17, %c16, %c0_18], %6 {strides = array<i32>} : memref<2x40x128xf32, #tpu.memory_space<vmem>>, vector<2x8x128xf32>,
    return
  }
  func.func @transform_0(%arg0: i32, %arg1: i32) -> (i32, i32, i32) {
    %c0_i32 = arith.constant 0 : i32
    %c0_i32_0 = arith.constant 0 : i32
    return %arg0, %c0_i32, %arg1 : i32, i32, i32
  }
  func.func @transform_1(%arg0: i32, %arg1: i32) -> (i32, i32, i32) {
    %c0_i32 = arith.constant 0 : i32
    %c0_i32_0 = arith.constant 0 : i32
    return %arg0, %c0_i32, %arg1 : i32, i32, i32
  }
  func.func @transform_2(%arg0: i32, %arg1: i32) -> (i32, i32, i32) {
    %c0_i32 = arith.constant 0 : i32
    %c0_i32_0 = arith.constant 0 : i32
    return %arg0, %c0_i32, %arg1 : i32, i32, i32
  }
  func.func @transform_3(%arg0: i32, %arg1: i32) -> (i32, i32, i32) {
    %c0_i32 = arith.constant 0 : i32
    %c0_i32_0 = arith.constant 0 : i32
    return %arg0, %c0_i32, %arg1 : i32, i32, i32
  }
}

</mosaic_0001>

<llo_original>
// kernel: tpu_custom_call.1
$region0: #{tpu_custom_call.1}
  #allocation0 [shape = 'u32[]', space=smem, size = 0x4, offset = 0x4, fixed_abs, tag = 'smem constant byte address 0x4 - core index']
  #allocation1 [shape = 'u32[72,128]{1,0:T(1,128)}', space=vmem, size = 0x9000, scoped, tag = 'internal scratch']
  %s0 = inlined_call_operand.hbm [shape: f32[2,8,256], index: 0, kind: input, shape index: {}]
  %s1 = inlined_call_operand.hbm [shape: f32[2,8,256], index: 1, kind: input, shape index: {}]
  %s2 = inlined_call_operand.hbm [shape: f32[2,8,256], index: 2, kind: input, shape index: {}]
  %s3 = inlined_call_operand.hbm [shape: f32[2,40,256], index: 3, kind: output, shape index: {}]
  %s4 = sld [smem:[#allocation0]]
  $region57: #{tpu_custom_call.1} parent=0
    _
  %s6 = ssub.s32 1, %s4
  %s7 = scalar_select 0, %s6, %s4
  $region1: #{tpu_custom_call.1} parent=0
    #allocation2 [shape = 'u8[16384]{0}', space=vmem, size = 0x4000, scoped, tag = 'input window, operand 0']
    #allocation3 [shape = 's32[2]{0}', space=sflag, size = 0x8, scoped, tag = 'scoped memory for tpu_custom_call.1']
    #allocation4 [shape = 's32[2]{0}', space=sflag, size = 0x8, scoped, tag = 'scoped memory for tpu_custom_call.1']
    #allocation5 [shape = 'u8[16384]{0}', space=vmem, size = 0x4000, scoped, tag = 'input window, operand 1']
    #allocation6 [shape = 's32[2]{0}', space=sflag, size = 0x8, scoped, tag = 'scoped memory for tpu_custom_call.1']
    #allocation7 [shape = 'u8[16384]{0}', space=vmem, size = 0x4000, scoped, tag = 'input window, operand 2']
    #allocation8 [shape = 'u8[81920]{0}', space=vmem, size = 0x14000, scoped, tag = 'output window, operand 0']
    %8 = vsyncpa [#allocation3], 0
    %s9 = scalar_lea.sflag [#allocation3], 1
    %10 = vsyncpa %s9, 0
    %11 = vsyncpa [#allocation6], 0
    %s12 = scalar_lea.sflag [#allocation6], 1
    %13 = vsyncpa %s12, 0
    %14 = vsyncpa [#allocation4], 0
    %s15 = scalar_lea.sflag [#allocation4], 1
    %16 = vsyncpa %s15, 0
    loop: start=0, step=1, limit=4
    $region2: #{tpu_custom_call.1} parent=1 // loop_pre_header
      _
    $region3: #{tpu_custom_call.1} parent=1 // loop_header
      %s18 = sphi 0, %s22
      %p19 = scmp.ge.s32.totalorder %s18, 4
      %s25 = sphi 0, %s37
      %s26 = sphi 0, %s33
      %s27 = sphi 0, %s25
      %s28 = sphi 0, %s26
      %s29 = sphi 0, %s27
      %s30 = sphi 0, %s28
      %s42 = sphi 0, %s44
      %s45 = sphi 0, %s42
      %s46 = sphi 0, %s45
      %s62 = sphi 0, %s46
      %s70 = sphi 0, %s72
      %s73 = sphi 0, %s70
      %s74 = sphi 0, %s73
      %s90 = sphi 0, %s74
      %s98 = sphi 0, %s100
      %s101 = sphi 0, %s98
      %s102 = sphi 0, %s101
      %s118 = sphi 0, %s102
      %s126 = sphi 0, %s128
      %s129 = sphi 0, %s126
      %s130 = sphi 0, %s129
      %s146 = sphi 0, %s130
    $region4: #{tpu_custom_call.1} parent=1 // loop_header_branch
      %21 = sbr.rel (%p19) target = $region8
    $region5: #{tpu_custom_call.1} parent=1 // loop_body
      %s23 = ssub.s32 %s18, 1
      %s24 = ssub.s32 %s18, 2
      %s31 = sadd.s32 1, %s26
      %p32 = scmp.ge.s32.totalorder %s31, 2
      %s33 = scalar_select %p32, 0, %s31
      %s34 = sadd.s32 1, %s25
      %s35 = scalar_select %p32, %s34, %s25
      %p36 = scmp.ge.s32.totalorder %s35, 1
      %s37 = scalar_select %p36, 0, %s35
      %s38 = ssub.s32 %s25, %s37
      %s39 = ssub.s32 %s26, %s33
      %s40 = sor.u32 %s38, %s39
      %p41 = scmp.eq.s32.totalorder %s40, 0
      %s43 = sadd.s32 %s42, 1
      %s44 = scalar_select %p41, %s42, %s43
      %p47 = pneg %p41
      %p48 = scmp.eq.s32.totalorder %s18, 1
      %p49 = por %p47, %p48
      %p50 = scmp.ne.s32.totalorder %s42, %s45
      %p51 = scmp.eq.s32.totalorder %s18, 0
      %p52 = por %p50, %p51
      %p53 = scmp.ne.s32.totalorder %s42, %s45
      %p54 = scmp.eq.s32.totalorder %s23, 1
      %p55 = por %p53, %p54
      %p56 = scmp.ne.s32.totalorder %s45, %s46
      %p57 = scmp.eq.s32.totalorder %s23, 0
      %p58 = por %p56, %p57
      %p59 = scmp.ne.s32.totalorder %s45, %s46
      %p60 = scmp.eq.s32.totalorder %s24, 1
      %p61 = por %p59, %p60
      %p63 = scmp.ne.s32.totalorder %s46, %s62
      %p64 = scmp.eq.s32.totalorder %s24, 0
      %p65 = por %p63, %p64
      %s66 = ssub.s32 %s25, %s37
      %s67 = ssub.s32 %s26, %s33
      %s68 = sor.u32 %s66, %s67
      %p69 = scmp.eq.s32.totalorder %s68, 0
      %s71 = sadd.s32 %s70, 1
      %s72 = scalar_select %p69, %s70, %s71
      %p75 = pneg %p69
      %p76 = scmp.eq.s32.totalorder %s18, 1
      %p77 = por %p75, %p76
      %p78 = scmp.ne.s32.totalorder %s70, %s73
      %p79 = scmp.eq.s32.totalorder %s18, 0
      %p80 = por %p78, %p79
      %p81 = scmp.ne.s32.totalorder %s70, %s73
      %p82 = scmp.eq.s32.totalorder %s23, 1
      %p83 = por %p81, %p82
      %p84 = scmp.ne.s32.totalorder %s73, %s74
      %p85 = scmp.eq.s32.totalorder %s23, 0
      %p86 = por %p84, %p85
      %p87 = scmp.ne.s32.totalorder %s73, %s74
      %p88 = scmp.eq.s32.totalorder %s24, 1
      %p89 = por %p87, %p88
      %p91 = scmp.ne.s32.totalorder %s74, %s90
      %p92 = scmp.eq.s32.totalorder %s24, 0
      %p93 = por %p91, %p92
      %s94 = ssub.s32 %s25, %s37
      %s95 = ssub.s32 %s26, %s33
      %s96 = sor.u32 %s94, %s95
      %p97 = scmp.eq.s32.totalorder %s96, 0
      %s99 = sadd.s32 %s98, 1
      %s100 = scalar_select %p97, %s98, %s99
      %p103 = pneg %p97
      %p104 = scmp.eq.s32.totalorder %s18, 1
      %p105 = por %p103, %p104
      %p106 = scmp.ne.s32.totalorder %s98, %s101
      %p107 = scmp.eq.s32.totalorder %s18, 0
      %p108 = por %p106, %p107
      %p109 = scmp.ne.s32.totalorder %s98, %s101
      %p110 = scmp.eq.s32.totalorder %s23, 1
      %p111 = por %p109, %p110
      %p112 = scmp.ne.s32.totalorder %s101, %s102
      %p113 = scmp.eq.s32.totalorder %s23, 0
      %p114 = por %p112, %p113
      %p115 = scmp.ne.s32.totalorder %s101, %s102
      %p116 = scmp.eq.s32.totalorder %s24, 1
      %p117 = por %p115, %p116
      %p119 = scmp.ne.s32.totalorder %s102, %s118
      %p120 = scmp.eq.s32.totalorder %s24, 0
      %p121 = por %p119, %p120
      %s122 = ssub.s32 %s25, %s37
      %s123 = ssub.s32 %s26, %s33
      %s124 = sor.u32 %s122, %s123
      %p125 = scmp.eq.s32.totalorder %s124, 0
      %s127 = sadd.s32 %s126, 1
      %s128 = scalar_select %p125, %s126, %s127
      %p131 = pneg %p125
      %p132 = scmp.eq.s32.totalorder %s18, 1
      %p133 = por %p131, %p132
      %p134 = scmp.ne.s32.totalorder %s126, %s129
      %p135 = scmp.eq.s32.totalorder %s18, 0
      %p136 = por %p134, %p135
      %p137 = scmp.ne.s32.totalorder %s126, %s129
      %p138 = scmp.eq.s32.totalorder %s23, 1
      %p139 = por %p137, %p138
      %p140 = scmp.ne.s32.totalorder %s129, %s130
      %p141 = scmp.eq.s32.totalorder %s23, 0
      %p142 = por %p140, %p141
      %p143 = scmp.ne.s32.totalorder %s129, %s130
      %p144 = scmp.eq.s32.totalorder %s24, 1
      %p145 = por %p143, %p144
      %p147 = scmp.ne.s32.totalorder %s130, %s146
      %p148 = scmp.eq.s32.totalorder %s24, 0
      %p149 = por %p147, %p148
      %p150 = scmp.le.s32.totalorder 1, %s18
      %p151 = scmp.lt.s32.totalorder %s18, 3
      %p152 = pnand %p150, %p151
      %p153 = pneg %p152
      // Predicated region
      $region9: #{tpu_custom_call.1} parent=5 // pred_check
        _
      $region10: #{tpu_custom_call.1} parent=5 // pred_check_branch
        %155 = sbr.rel (%p152) target = $region12
      $region11: #{tpu_custom_call.1} parent=5 // pred_region
        %s156 = ssub.s32 %s18, 1
      $region12: #{tpu_custom_call.1} parent=5 // pred_fallthru
        _
      %p157 = scmp.lt.s32.totalorder %s18, 2
      // Predicated region
      $region13: #{tpu_custom_call.1} parent=5 // pred_check
        %p158 = pneg %p157
      $region14: #{tpu_custom_call.1} parent=5 // pred_check_branch
        %160 = sbr.rel (%p158) target = $region16
      $region15: #{tpu_custom_call.1} parent=5 // pred_region
        // Predicated region
        $region17: #{tpu_custom_call.1} parent=15 // pred_check
          %p161 = pneg %p52
        $region18: #{tpu_custom_call.1} parent=15 // pred_check_branch
          %163 = sbr.rel (%p161) target = $region20
        $region19: #{tpu_custom_call.1} parent=15 // pred_region
          %s164 = sand.u32 %s42, 1
          %s165 = scalar_lea.sflag [#allocation3], %s164
          %s166 = sand.u32 %s42, 1
          %s167 = smul.addr %s166, 16
          %s168 = scalar_lea.vmem [#allocation2], %s167
          %s169 = smul.u32 2, %s25
          %171 = vsyncadd %s165, 0
          %s172 = smul.addr %s169, 2
          %s173 = sadd.s32 %s26, %s172
          %s174 = smul.addr %s173, 8
          %s175 = scalar_lea.hbm %s0, %s174
          %s176 = sshll.u32 %s175, 4
          %s177 = int_to_ptr.hbm [resolvable:$true] %s176
          %s178 = sshll.u32 %s168, 4
          %s179 = int_to_ptr.vmem [resolvable:$true] %s178
          %184 = dma.hbm_to_vmem [thread:$0]  %s177, 256, %s179, %s165, 256, 128, 8
        $region20: #{tpu_custom_call.1} parent=15 // pred_fallthru
          _
        // Predicated region
        $region21: #{tpu_custom_call.1} parent=15 // pred_check
          %p185 = pneg %p80
        $region22: #{tpu_custom_call.1} parent=15 // pred_check_branch
          %187 = sbr.rel (%p185) target = $region24
        $region23: #{tpu_custom_call.1} parent=15 // pred_region
          %s188 = sand.u32 %s18, 1
          %s189 = scalar_lea.sflag [#allocation6], %s188
          %s190 = sand.u32 %s70, 1
          %s191 = smul.addr %s190, 16
          %s192 = scalar_lea.vmem [#allocation5], %s191
          %s193 = smul.u32 2, %s25
          %195 = vsyncadd %s189, 0
          %s196 = smul.addr %s193, 2
          %s197 = sadd.s32 %s26, %s196
          %s198 = smul.addr %s197, 8
          %s199 = scalar_lea.hbm %s1, %s198
          %s200 = sshll.u32 %s199, 4
          %s201 = int_to_ptr.hbm [resolvable:$true] %s200
          %s202 = sshll.u32 %s192, 4
          %s203 = int_to_ptr.vmem [resolvable:$true] %s202
          %208 = dma.hbm_to_vmem [thread:$0]  %s201, 256, %s203, %s189, 256, 128, 8
        $region24: #{tpu_custom_call.1} parent=15 // pred_fallthru
          _
        // Predicated region
        $region25: #{tpu_custom_call.1} parent=15 // pred_check
          %p209 = pneg %p108
        $region26: #{tpu_custom_call.1} parent=15 // pred_check_branch
          %211 = sbr.rel (%p209) target = $region28
        $region27: #{tpu_custom_call.1} parent=15 // pred_region
          %s212 = sand.u32 %s18, 1
          %s213 = scalar_lea.sflag [#allocation6], %s212
          %s214 = sand.u32 %s98, 1
          %s215 = smul.addr %s214, 16
          %s216 = scalar_lea.vmem [#allocation7], %s215
          %s217 = smul.u32 2, %s25
          %219 = vsyncadd %s213, 0
          %s220 = smul.addr %s217, 2
          %s221 = sadd.s32 %s26, %s220
          %s222 = smul.addr %s221, 8
          %s223 = scalar_lea.hbm %s2, %s222
          %s224 = sshll.u32 %s223, 4
          %s225 = int_to_ptr.hbm [resolvable:$true] %s224
          %s226 = sshll.u32 %s216, 4
          %s227 = int_to_ptr.vmem [resolvable:$true] %s226
          %232 = dma.hbm_to_vmem [thread:$0]  %s225, 256, %s227, %s213, 256, 128, 8
        $region28: #{tpu_custom_call.1} parent=15 // pred_fallthru
          _
      $region16: #{tpu_custom_call.1} parent=5 // pred_fallthru
        _
      %p233 = scmp.le.s32.totalorder 1, %s18
      %p234 = scmp.lt.s32.totalorder %s18, 3
      %p235 = pnand %p233, %p234
      %p236 = pneg %p235
      // Predicated region
      $region29: #{tpu_custom_call.1} parent=5 // pred_check
        _
      $region30: #{tpu_custom_call.1} parent=5 // pred_check_branch
        %238 = sbr.rel (%p235) target = $region32
      $region31: #{tpu_custom_call.1} parent=5 // pred_region
        %s239 = ssub.s32 %s18, 1
        %s240 = sand.u32 %s45, 1
        %s241 = scalar_lea.sflag [#allocation3], %s240
        %s242 = sand.u32 %s45, 1
        %s243 = smul.addr %s242, 16
        %s244 = scalar_lea.vmem [#allocation2], %s243
        // Predicated region
        $region33: #{tpu_custom_call.1} parent=31 // pred_check
          %p245 = pneg %p58
        $region34: #{tpu_custom_call.1} parent=31 // pred_check_branch
          %247 = sbr.rel (%p245) target = $region36
        $region35: #{tpu_custom_call.1} parent=31 // pred_region
          %249 = dma.done %s241, 256
        $region36: #{tpu_custom_call.1} parent=31 // pred_fallthru
          _
        %s250 = sand.u32 %s23, 1
        %s251 = scalar_lea.sflag [#allocation6], %s250
        %s252 = sand.u32 %s73, 1
        %s253 = smul.addr %s252, 16
        %s254 = scalar_lea.vmem [#allocation5], %s253
        // Predicated region
        $region37: #{tpu_custom_call.1} parent=31 // pred_check
          %p255 = pneg %p86
        $region38: #{tpu_custom_call.1} parent=31 // pred_check_branch
          %257 = sbr.rel (%p255) target = $region40
        $region39: #{tpu_custom_call.1} parent=31 // pred_region
          %259 = dma.done %s251, 256
        $region40: #{tpu_custom_call.1} parent=31 // pred_fallthru
          _
        %s260 = sand.u32 %s23, 1
        %s261 = scalar_lea.sflag [#allocation6], %s260
        %s262 = sand.u32 %s101, 1
        %s263 = smul.addr %s262, 16
        %s264 = scalar_lea.vmem [#allocation7], %s263
        // Predicated region
        $region41: #{tpu_custom_call.1} parent=31 // pred_check
          %p265 = pneg %p114
        $region42: #{tpu_custom_call.1} parent=31 // pred_check_branch
          %267 = sbr.rel (%p265) target = $region44
        $region43: #{tpu_custom_call.1} parent=31 // pred_region
          %269 = dma.done %s261, 256
        $region44: #{tpu_custom_call.1} parent=31 // pred_fallthru
          _
        %s270 = sand.u32 %s45, 1
        %s271 = scalar_lea.sflag [#allocation3], %s270
        %s272 = sand.u32 %s45, 1
        %s273 = smul.addr %s272, 16
        %s274 = scalar_lea.vmem [#allocation2], %s273
        %p275 = pneg %p58
        %p276 = pneg %p55
        %s277 = sand.u32 %s23, 1
        %s278 = scalar_lea.sflag [#allocation6], %s277
        %s279 = sand.u32 %s73, 1
        %s280 = smul.addr %s279, 16
        %s281 = scalar_lea.vmem [#allocation5], %s280
        %p282 = pneg %p86
        %p283 = pneg %p83
        %s284 = sand.u32 %s23, 1
        %s285 = scalar_lea.sflag [#allocation6], %s284
        %s286 = sand.u32 %s101, 1
        %s287 = smul.addr %s286, 16
        %s288 = scalar_lea.vmem [#allocation7], %s287
        %p289 = pneg %p114
        %p290 = pneg %p111
        %p291 = pneg %p142
        %p292 = pneg %p139
        %s293 = sand.u32 %s129, 1
        %s294 = scalar_lea.sflag [#allocation4], %s293
        %s295 = sand.u32 %s129, 1
        %s296 = smul.addr %s295, 80
        %s297 = scalar_lea.vmem [#allocation8], %s296
        %s298 = smul.u32 2, %s27
        %s299 = smul.u32 2, %s27
        %s300 = smul.u32 2, %s27
        %s301 = smul.u32 2, %s27
        %v302 = vld [vmem:[%s244] sm:$0xff]
        %v303 = vld [vmem:[%s244 + $0x8] sm:$0xff]
        %304 = vst [vmem:[%s297] sm:$0xff] %v302
        %305 = vst [vmem:[%s297 + $0x28] sm:$0xff] %v303
        %306 = vst [vmem:[%s297 + $0x18] sm:$0xff] %v302
        %307 = vst [vmem:[%s297 + $0x40] sm:$0xff] %v303
        %v308 = vld [vmem:[%s254] sm:$0xff]
        %v309 = vld [vmem:[%s254 + $0x8] sm:$0xff]
        %310 = vst [vmem:[%s297 + $0x8] sm:$0xff] %v308
        %311 = vst [vmem:[%s297 + $0x30] sm:$0xff] %v309
        %312 = vst [vmem:[%s297 + $0x20] sm:$0xff] %v308
        %313 = vst [vmem:[%s297 + $0x48] sm:$0xff] %v309
        %v314 = vld [vmem:[%s264] sm:$0xff]
        %v315 = vld [vmem:[%s264 + $0x8] sm:$0xff]
        %316 = vst [vmem:[%s297 + $0x10] sm:$0xff] %v314
        %317 = vst [vmem:[%s297 + $0x38] sm:$0xff] %v315
        %s318 = sand.u32 %s129, 1
        %s319 = scalar_lea.sflag [#allocation4], %s318
        %s320 = sand.u32 %s129, 1
        %s321 = smul.addr %s320, 80
        %s322 = scalar_lea.vmem [#allocation8], %s321
        // Predicated region
        $region45: #{tpu_custom_call.1} parent=31 // pred_check
          %p323 = pneg %p139
        $region46: #{tpu_custom_call.1} parent=31 // pred_check_branch
          %325 = sbr.rel (%p323) target = $region48
        $region47: #{tpu_custom_call.1} parent=31 // pred_region
          %s326 = smul.u32 2, %s27
          %328 = vsyncadd %s319, 0
          %s329 = smul.addr %s326, 10
          %s330 = sadd.s32 %s28, %s329
          %s331 = smul.addr %s330, 8
          %s332 = scalar_lea.hbm %s3, %s331
          %s333 = sshll.u32 %s322, 4
          %s334 = int_to_ptr.vmem [resolvable:$true] %s333
          %s335 = sshll.u32 %s332, 4
          %s336 = int_to_ptr.hbm [resolvable:$true] %s335
          %341 = dma.vmem_to_hbm [thread:$0]  %s334, 1280, %s336, %s319, 128, 256, 8
        $region48: #{tpu_custom_call.1} parent=31 // pred_fallthru
          _
      $region32: #{tpu_custom_call.1} parent=5 // pred_fallthru
        _
      %p342 = scmp.le.s32.totalorder 2, %s18
      // Predicated region
      $region49: #{tpu_custom_call.1} parent=5 // pred_check
        %p343 = pneg %p342
      $region50: #{tpu_custom_call.1} parent=5 // pred_check_branch
        %345 = sbr.rel (%p343) target = $region52
      $region51: #{tpu_custom_call.1} parent=5 // pred_region
        %s346 = ssub.s32 %s18, 2
        // Predicated region
        $region53: #{tpu_custom_call.1} parent=51 // pred_check
          %p347 = pneg %p145
        $region54: #{tpu_custom_call.1} parent=51 // pred_check_branch
          %349 = sbr.rel (%p347) target = $region56
        $region55: #{tpu_custom_call.1} parent=51 // pred_region
          %s350 = sand.u32 %s130, 1
          %s351 = scalar_lea.sflag [#allocation4], %s350
          %s352 = sand.u32 %s130, 1
          %s353 = smul.addr %s352, 80
          %s354 = scalar_lea.vmem [#allocation8], %s353
          %356 = dma.done %s351, 1280
        $region56: #{tpu_custom_call.1} parent=51 // pred_fallthru
          _
      $region52: #{tpu_custom_call.1} parent=5 // pred_fallthru
        _
    $region6: #{tpu_custom_call.1} parent=1 // loop_footer
      %s22 = sadd.s32 1, %s18
    $region7: #{tpu_custom_call.1} parent=1 // loop_footer_branch
      %17 = sbr.rel target = $region3
    $region8: #{tpu_custom_call.1} parent=1 // loop_exit
      _
    %357 = vsyncpa [#allocation3], 1
    %s358 = scalar_lea.sflag [#allocation3], 1
    %359 = vsyncpa %s358, 1
    %360 = vsyncpa [#allocation6], 1
    %s361 = scalar_lea.sflag [#allocation6], 1
    %362 = vsyncpa %s361, 1
    %363 = vsyncpa [#allocation4], 1
    %s364 = scalar_lea.sflag [#allocation4], 1
    %365 = vsyncpa %s364, 1

</llo_original>
